<compile_context>
chip_gen: v7x
topology: tpu7x:2x2x1
jax: 0.10.0
libtpu: 0.0.40
codegen_flags: <defaults>
</compile_context>

<pallas_src>
import functools
import math

import jax
import jax.numpy as jnp
from jax.experimental import pallas as pl
from jax.experimental.pallas import tpu as pltpu


# --------------------------- hardware heuristics -----------------------------

def _device_kind():
    try:
        return jax.devices()[0].device_kind.lower()
    except Exception:
        return ""


def _is_v7():
    return "v7" in _device_kind()


def _has_bf16_vpu():
    # v6e / v7x have native bf16 VPU + EUP; v5e and older do not.
    k = _device_kind()
    return not any(tag in k for tag in ("v2", "v3", "v4", "v5"))


def _default_compute_dtype():
    return jnp.bfloat16 if _has_bf16_vpu() else jnp.float32


def _default_tn_max():
    # Lane-dense out-tile width: bigger on v5e/v6e (128 MiB VMEM), capped on
    # v7x (64 MiB per TC).
    return 4096 if _is_v7() else 8192


def _vmem_limit_bytes():
    return (48 << 20) if _is_v7() else (64 << 20)


def _min_batch_tiles():
    # v7x has 2 TensorCores per chip: aim for >=2 steps on a "parallel" axis.
    return 2 if _is_v7() else 1


# ------------------------------ tiling helpers --------------------------------

def _round_up(x, m):
    return ((x + m - 1) // m) * m


def _choose_tb(batch, tb_max, min_tiles=1):
    """Sublane (batch) tile: multiple of 8, minimal padding waste, honoring a
    minimum tile count (for v7x megacore) when the batch is large enough."""
    tb_max = max(8, (tb_max // 8) * 8)
    want_tiles = min_tiles if batch >= 8 * min_tiles else 1
    cand_hi = min(tb_max, _round_up(batch, 8))
    best = None
    tb = cand_hi
    while tb >= 8:
        pb = _round_up(batch, tb)
        tiles = pb // tb
        waste = pb - batch
        key = (tiles < want_tiles, waste, -tb)  # meet tile target, min waste, big tb
        if best is None or key < best[0]:
            best = (key, tb, pb)
        tb -= 8
    return best[1], best[2]


def _choose_tn(padded_dim, tn_max):
    """Lane tile: multiple of 128 that divides padded_dim exactly (padded_dim
    is itself a multiple of 128), as large as possible but <= tn_max."""
    tn_max = max(128, (tn_max // 128) * 128)
    if padded_dim <= tn_max:
        return padded_dim
    m = padded_dim // 128
    best = 128
    for d in range(1, m + 1):
        if m % d == 0 and d * 128 <= tn_max:
            best = d * 128
    return best


# --------------------------------- kernels ------------------------------------

def _vf_flat_kernel(h_ref, w2_ref, b2_ref, out_ref, *, compute_dtype):
    # h: (TB, 2) f32, w2: (2, TN) bf16, b2: (1, TN) bf16, out: (TB, TN)
    h = h_ref[...].astype(compute_dtype)
    w2 = w2_ref[...].astype(compute_dtype)
    b2 = b2_ref[...].astype(compute_dtype)
    # K = 2 contraction as VPU broadcast-FMA (no MXU push/pop for a 2-row matmul).
    y = h[:, 0:1] * w2[0:1, :] + h[:, 1:2] * w2[1:2, :] + b2
    out_ref[...] = jnp.tanh(y).astype(out_ref.dtype)


def _vf_dx_kernel(h_ref, dx_ref, w2_ref, b2_ref, out_ref, *,
                  compute_dtype, input_channels):
    # Fused f(z)·dX: h (TB,2), dx (TB,C), w2 (2,C,TH), b2 (C,TH), out (TB,TH).
    h = h_ref[...].astype(compute_dtype)
    dx = dx_ref[...].astype(jnp.float32)
    w2 = w2_ref[...].astype(compute_dtype)
    b2 = b2_ref[...].astype(compute_dtype)
    acc = jnp.zeros(out_ref.shape, jnp.float32)
    for c in range(input_channels):  # small static loop (C ~ 2-8), unrolled
        y = jnp.tanh(h[:, 0:1] * w2[0, c:c + 1, :]
                     + h[:, 1:2] * w2[1, c:c + 1, :]
                     + b2[c:c + 1, :])
        acc = acc + y.astype(jnp.float32) * dx[:, c:c + 1]
    out_ref[...] = acc.astype(out_ref.dtype)


# -------------------------------- wrappers -------------------------------------

def _hoisted_layer1(z2, params):
    # Layer 1 is O(batch*hidden*2): compute it once in the wrapper so it is not
    # re-executed for every out_dim tile inside the kernel.
    return jnp.maximum(z2 @ params["w1"] + params["b1"], 0.0)  # (batch, 2) f32


def cde_func_forward(t, z, params, *, compute_dtype=None, out_dtype=jnp.float32,
                     tb_max=256, tn_max=None, min_batch_tiles=None):
    """CDEFunc.forward: z (..., hidden) -> (..., hidden, input).

    Leading dims (e.g. several solver evaluations / time points) are folded into
    one batch axis so they amortize a single pallas_call.
    """
    del t  # unused, matches the PyTorch module
    if compute_dtype is None:
        compute_dtype = _default_compute_dtype()
    if tn_max is None:
        tn_max = _default_tn_max()
    if min_batch_tiles is None:
        min_batch_tiles = _min_batch_tiles()

    hidden = params["hidden_channels"]
    inp = params["input_channels"]
    out_dim = hidden * inp
    padded_out = params["padded_out"]
    w2p, b2p = params["w2_flat"], params["b2_flat"]  # pre-padded, bf16, once

    lead = z.shape[:-1]
    batch = math.prod(lead) if lead else 1
    z2 = z.reshape(batch, hidden).astype(jnp.float32)
    h = _hoisted_layer1(z2, params)

    tb, padded_batch = _choose_tb(batch, tb_max, min_batch_tiles)
    if padded_batch != batch:
        h = jnp.pad(h, ((0, padded_batch - batch), (0, 0)))

    tn = _choose_tn(padded_out, tn_max)
    grid = (padded_batch // tb, padded_out // tn)

    out_flat = pl.pallas_call(
        functools.partial(_vf_flat_kernel, compute_dtype=compute_dtype),
        out_shape=jax.ShapeDtypeStruct((padded_batch, padded_out), out_dtype),
        grid=grid,
        in_specs=[
            pl.BlockSpec((tb, 2), lambda i, j: (i, 0)),
            pl.BlockSpec((2, tn), lambda i, j: (0, j)),
            pl.BlockSpec((1, tn), lambda i, j: (0, j)),
        ],
        out_specs=pl.BlockSpec((tb, tn), lambda i, j: (i, j)),
        compiler_params=pltpu.CompilerParams(
            dimension_semantics=("parallel", "parallel"),
            vmem_limit_bytes=_vmem_limit_bytes(),
        ),
    )(h, w2p, b2p)

    if padded_batch != batch:
        out_flat = out_flat[:batch]
    if padded_out != out_dim:          # no-op when out_dim is a multiple of 128
        out_flat = out_flat[:, :out_dim]
    return out_flat.reshape(*lead, hidden, inp)


def cde_func_dx_forward(t, z, dX, params, *, compute_dtype=None,
                        out_dtype=jnp.float32, tb_max=256, th_max=None,
                        min_batch_tiles=None):
    """Fused cdeint hot path: einsum('...hc,...c->...h', CDEFunc(z), dX).

    Writes only (batch, hidden) to HBM instead of (batch, hidden*input),
    shrinking output traffic by the input-channel factor.
    """
    del t
    if compute_dtype is None:
        compute_dtype = _default_compute_dtype()
    if th_max is None:
        th_max = _default_tn_max()
    if min_batch_tiles is None:
        min_batch_tiles = _min_batch_tiles()

    hidden = params["hidden_channels"]
    inp = params["input_channels"]
    padded_hidden = params["padded_hidden"]
    w2r, b2r = params["w2_cxh"], params["b2_cxh"]  # (2,C,Hpad), (C,Hpad), bf16

    lead = z.shape[:-1]
    batch = math.prod(lead) if lead else 1
    z2 = z.reshape(batch, hidden).astype(jnp.float32)
    dx2 = dX.reshape(batch, inp).astype(jnp.float32)
    h = _hoisted_layer1(z2, params)

    tb, padded_batch = _choose_tb(batch, tb_max, min_batch_tiles)
    if padded_batch != batch:
        pad = ((0, padded_batch - batch), (0, 0))
        h = jnp.pad(h, pad)
        dx2 = jnp.pad(dx2, pad)

    th = _choose_tn(padded_hidden, th_max)
    grid = (padded_batch // tb, padded_hidden // th)

    out = pl.pallas_call(
        functools.partial(_vf_dx_kernel, compute_dtype=compute_dtype,
                          input_channels=inp),
        out_shape=jax.ShapeDtypeStruct((padded_batch, padded_hidden), out_dtype),
        grid=grid,
        in_specs=[
            pl.BlockSpec((tb, 2), lambda i, j: (i, 0)),
            pl.BlockSpec((tb, inp), lambda i, j: (i, 0)),
            pl.BlockSpec((2, inp, th), lambda i, j: (0, 0, j)),
            pl.BlockSpec((inp, th), lambda i, j: (0, j)),
        ],
        out_specs=pl.BlockSpec((tb, th), lambda i, j: (i, j)),
        compiler_params=pltpu.CompilerParams(
            dimension_semantics=("parallel", "parallel"),
            vmem_limit_bytes=_vmem_limit_bytes(),
        ),
    )(h, dx2, w2r, b2r)

    out = out[:batch, :hidden]
    return out.reshape(*lead, hidden)


# ------------------------------ params / reference -----------------------------

def init_params(key, input_channels, hidden_channels):
    """Deterministic init matching the PyTorch layer shapes.

    linear1: Linear(hidden, 2)          -> w1 (hidden, 2), b1 (1, 2), f32
    linear2: Linear(2, hidden*input)    -> w2 (2, hidden*input), b2 (1, hidden*input)
    The O(hidden*input) operands are streamed in bf16 (intentional precision
    choice) and pre-padded / re-laid-out ONCE here, not per forward call.
    """
    k1, k2, k3, k4 = jax.random.split(key, 4)
    out_dim = hidden_channels * input_channels
    bound1 = 1.0 / float(hidden_channels) ** 0.5
    bound2 = 1.0 / float(2) ** 0.5
    w1 = jax.random.uniform(k1, (hidden_channels, 2), jnp.float32, -bound1, bound1)
    b1 = jax.random.uniform(k2, (1, 2), jnp.float32, -bound1, bound1)
    w2 = jax.random.uniform(k3, (2, out_dim), jnp.float32, -bound2, bound2)
    b2 = jax.random.uniform(k4, (1, out_dim), jnp.float32, -bound2, bound2)

    w2s = w2.astype(jnp.bfloat16)
    b2s = b2.astype(jnp.bfloat16)

    # Flat layout for CDEFunc.forward, padded to a lane-dense 128 multiple.
    padded_out = _round_up(out_dim, 128)
    w2_flat = jnp.pad(w2s, ((0, 0), (0, padded_out - out_dim)))
    b2_flat = jnp.pad(b2s, ((0, 0), (0, padded_out - out_dim)))

    # (2, input, hidden) layout for the fused dX kernel, hidden padded to 128.
    padded_hidden = _round_up(hidden_channels, 128)
    w2_cxh = jnp.transpose(w2s.reshape(2, hidden_channels, input_channels), (0, 2, 1))
    b2_cxh = jnp.transpose(b2s.reshape(hidden_channels, input_channels), (1, 0))
    w2_cxh = jnp.pad(w2_cxh, ((0, 0), (0, 0), (0, padded_hidden - hidden_channels)))
    b2_cxh = jnp.pad(b2_cxh, ((0, 0), (0, padded_hidden - hidden_channels)))

    return {
        "w1": w1, "b1": b1, "w2": w2, "b2": b2,
        "w2_flat": w2_flat, "b2_flat": b2_flat,
        "w2_cxh": w2_cxh, "b2_cxh": b2_cxh,
        "hidden_channels": hidden_channels,
        "input_channels": input_channels,
        "padded_out": padded_out,
        "padded_hidden": padded_hidden,
    }


def reference_forward(z, params):
    hidden, inp = params["hidden_channels"], params["input_channels"]
    w1, b1 = params["w1"], params["b1"]
    # Mirror the kernel's bf16 streaming of w2/b2 (intentional precision choice).
    w2 = params["w2"].astype(jnp.bfloat16).astype(jnp.float32)
    b2 = params["b2"].astype(jnp.bfloat16).astype(jnp.float32)
    lead = z.shape[:-1]
    zf = z.reshape(-1, hidden).astype(jnp.float32)
    h = jnp.maximum(zf @ w1 + b1, 0.0)
    y = jnp.tanh(h[:, 0:1] * w2[0:1, :] + h[:, 1:2] * w2[1:2, :] + b2)
    return y.reshape(*lead, hidden, inp)


def reference_dx_forward(z, dX, params):
    f = reference_forward(z, params)                        # (..., hidden, input)
    return (f * dX[..., None, :].astype(jnp.float32)).sum(-1)


# ----------------------------------- main --------------------------------------

if __name__ == "__main__":
    batch = 2
    input_channels = 4
    hidden_channels = 32
    num_solver_evals = 8   # several RK stages / time points amortize one call

    key = jax.random.PRNGKey(0)
    kz, kzs, kdx, kp = jax.random.split(key, 4)
    params = init_params(kp, input_channels, hidden_channels)

    # --- CDEFunc.forward (module semantics), f32 compute path, tight check ---
    z = jax.random.normal(kz, (batch, hidden_channels), jnp.float32)
    out = jax.block_until_ready(
        cde_func_forward(0.0, z, params, compute_dtype=jnp.float32))
    ref = reference_forward(z, params)
    assert out.shape == (batch, hidden_channels, input_channels)
    assert jnp.allclose(out, ref, atol=1e-5, rtol=1e-5)

    # --- many solver evaluations folded into ONE call, auto compute dtype ---
    auto_dtype = _default_compute_dtype()
    tol = 5e-2 if auto_dtype == jnp.bfloat16 else 1e-5
    z_stack = jax.random.normal(
        kzs, (num_solver_evals, batch, hidden_channels), jnp.float32)
    out_stack = jax.block_until_ready(cde_func_forward(0.0, z_stack, params))
    ref_stack = reference_forward(z_stack, params)
    assert out_stack.shape == (
        num_solver_evals, batch, hidden_channels, input_channels)
    assert jnp.allclose(out_stack, ref_stack, atol=tol, rtol=tol)

    # --- fused f(z)·dX contraction (the cdeint hot path) ---
    dX = jax.random.normal(
        kdx, (num_solver_evals, batch, input_channels), jnp.float32)
    out_dx = jax.block_until_ready(cde_func_dx_forward(0.0, z_stack, dX, params))
    ref_dx = reference_dx_forward(z_stack, dX, params)
    assert out_dx.shape == (num_solver_evals, batch, hidden_channels)
    tol_dx = 8e-2 if auto_dtype == jnp.bfloat16 else 1e-4
    assert jnp.allclose(out_dx, ref_dx, atol=tol_dx, rtol=tol_dx)

    print("KERNEL_OK")
</pallas_src>

<mosaic_0001>
module attributes {stable_mosaic.version = 11 : i64} {
  func.func @_vf_flat_kernel(%arg0: i32, %arg1: i32, %arg2: memref<8x2xf32, #tpu.memory_space<vmem>>, %arg3: memref<2x128xbf16, #tpu.memory_space<vmem>>, %arg4: memref<1x128xbf16, #tpu.memory_space<vmem>>, %arg5: memref<8x128xf32, #tpu.memory_space<vmem>>) attributes {dimension_semantics = [#tpu.dimension_semantics<parallel>, #tpu.dimension_semantics<parallel>], iteration_bounds = array<i64: 1, 1>, scalar_prefetch = 0 : i64, scratch_operands = 0 : i64, tpu.core_type = #tpu.core_type<tc>, window_params = [{transform_indices = @transform_0, window_bounds = array<i64: 8, 2>}, {transform_indices = @transform_1, window_bounds = array<i64: 2, 128>}, {transform_indices = @transform_2, window_bounds = array<i64: 1, 128>}, {transform_indices = @transform_3, window_bounds = array<i64: 8, 128>}]} {
    %c0 = arith.constant 0 : index
    %c0_0 = arith.constant 0 : index
    %0 = vector.load %arg2[%c0, %c0_0] : memref<8x2xf32, #tpu.memory_space<vmem>>, vector<8x2xf32>
    %c0_1 = arith.constant 0 : index
    %c0_2 = arith.constant 0 : index
    %1 = vector.load %arg3[%c0_1, %c0_2] : memref<2x128xbf16, #tpu.memory_space<vmem>>, vector<2x128xbf16>
    %2 = arith.extf %1 : vector<2x128xbf16> to vector<2x128xf32>
    %c0_3 = arith.constant 0 : index
    %c0_4 = arith.constant 0 : index
    %3 = vector.load %arg4[%c0_3, %c0_4] : memref<1x128xbf16, #tpu.memory_space<vmem>>, vector<1x128xbf16>
    %4 = arith.extf %3 : vector<1x128xbf16> to vector<1x128xf32>
    %5 = vector.extract_strided_slice %0 {offsets = [0, 0], sizes = [8, 1], strides = [1, 1]} : vector<8x2xf32> to vector<8x1xf32>
    %6 = vector.extract_strided_slice %2 {offsets = [0, 0], sizes = [1, 128], strides = [1, 1]} : vector<2x128xf32> to vector<1x128xf32>
    %7 = vector.broadcast %5 : vector<8x1xf32> to vector<8x128xf32>
    %8 = vector.broadcast %6 : vector<1x128xf32> to vector<8x128xf32>
    %9 = arith.mulf %7, %8 : vector<8x128xf32>
    %10 = vector.extract_strided_slice %0 {offsets = [0, 1], sizes = [8, 1], strides = [1, 1]} : vector<8x2xf32> to vector<8x1xf32>
    %11 = vector.extract_strided_slice %2 {offsets = [1, 0], sizes = [1, 128], strides = [1, 1]} : vector<2x128xf32> to vector<1x128xf32>
    %12 = vector.broadcast %10 : vector<8x1xf32> to vector<8x128xf32>
    %13 = vector.broadcast %11 : vector<1x128xf32> to vector<8x128xf32>
    %14 = arith.mulf %12, %13 : vector<8x128xf32>
    %15 = arith.addf %9, %14 : vector<8x128xf32>
    %16 = vector.broadcast %4 : vector<1x128xf32> to vector<8x128xf32>
    %17 = arith.addf %15, %16 : vector<8x128xf32>
    %18 = math.tanh %17 : vector<8x128xf32>
    %c0_5 = arith.constant 0 : index
    %c0_6 = arith.constant 0 : index
    %19 = vector.load %arg5[%c0_5, %c0_6] : memref<8x128xf32, #tpu.memory_space<vmem>>, vector<8x128xf32>
    tpu.vector_store %arg5[%c0_5, %c0_6], %18 {strides = array<i32>} : memref<8x128xf32, #tpu.memory_space<vmem>>, vector<8x128xf32>,
    return
  }
  func.func @transform_0(%arg0: i32, %arg1: i32) -> (i32, i32) {
    %c0_i32 = arith.constant 0 : i32
    %c0_i32_0 = arith.constant 0 : i32
    return %arg0, %c0_i32 : i32, i32
  }
  func.func @transform_1(%arg0: i32, %arg1: i32) -> (i32, i32) {
    %c0_i32 = arith.constant 0 : i32
    %c0_i32_0 = arith.constant 0 : i32
    return %c0_i32, %arg1 : i32, i32
  }
  func.func @transform_2(%arg0: i32, %arg1: i32) -> (i32, i32) {
    %c0_i32 = arith.constant 0 : i32
    %c0_i32_0 = arith.constant 0 : i32
    return %c0_i32, %arg1 : i32, i32
  }
  func.func @transform_3(%arg0: i32, %arg1: i32) -> (i32, i32) {
    %c0_i32 = arith.constant 0 : i32
    return %arg0, %arg1 : i32, i32
  }
}

</mosaic_0001>

<llo_original>
// kernel: tpu_custom_call.1
$region0: #{tpu_custom_call.1}
  #allocation0 [shape = 'u32[]', space=smem, size = 0x4, offset = 0x4, fixed_abs, tag = 'smem constant byte address 0x4 - core index']
  #allocation1 [shape = 'u32[144,128]{1,0:T(1,128)}', space=vmem, size = 0x12000, scoped, tag = 'internal scratch']
  %s0 = inlined_call_operand.hbm [shape: f32[8,2], index: 0, kind: input, shape index: {}]
  %s1 = inlined_call_operand.hbm [shape: bf16[2,128], index: 1, kind: input, shape index: {}]
  %s2 = inlined_call_operand.hbm [shape: bf16[1,128], index: 2, kind: input, shape index: {}]
  %s3 = inlined_call_operand.hbm [shape: f32[8,128], index: 3, kind: output, shape index: {}]
  %s4 = sld [smem:[#allocation0]]
  $region34: #{tpu_custom_call.1} parent=0
    _
  %s6 = ssub.s32 1, %s4
  %s7 = scalar_select 0, %s6, %s4
  $region1: #{tpu_custom_call.1} parent=0
    #allocation2 [shape = 'u8[4096]{0}', space=vmem, size = 0x1000, scoped, tag = 'input window, operand 0, single buffered']
    #allocation3 [shape = 's32[1]{0}', space=sflag, size = 0x4, scoped, tag = 'scoped memory for tpu_custom_call.1']
    #allocation4 [shape = 's32[1]{0}', space=sflag, size = 0x4, scoped, tag = 'scoped memory for tpu_custom_call.1']
    #allocation5 [shape = 'u8[512]{0}', space=vmem, size = 0x400, scoped, tag = 'input window, operand 1, single buffered']
    #allocation6 [shape = 's32[1]{0}', space=sflag, size = 0x4, scoped, tag = 'scoped memory for tpu_custom_call.1']
    #allocation7 [shape = 'u8[512]{0}', space=vmem, size = 0x400, scoped, tag = 'input window, operand 2, single buffered']
    #allocation8 [shape = 'u8[4096]{0}', space=vmem, size = 0x1000, scoped, tag = 'output window, operand 0, single buffered']
    %8 = vsyncpa [#allocation3], 0
    %9 = vsyncpa [#allocation6], 0
    %10 = vsyncpa [#allocation4], 0
    // Predicated region
    $region2: #{tpu_custom_call.1} parent=1 // pred_check
      _
    $region3: #{tpu_custom_call.1} parent=1 // pred_check_branch
      %12 = sbr.rel (0) target = $region5
    $region4: #{tpu_custom_call.1} parent=1 // pred_region
      %s14 = ssub.s32 128, 128
      %15 = vsyncadd [#allocation3], %s14
      %s17 = sshll.u32 [#allocation2], 4
      %s18 = int_to_ptr.vmem [resolvable:$true] %s17
      %20 = dma.hbm_to_vmem [thread:$0]  %s0, 128, %s18, [#allocation3]
    $region5: #{tpu_custom_call.1} parent=1 // pred_fallthru
      _
    // Predicated region
    $region6: #{tpu_custom_call.1} parent=1 // pred_check
      _
    $region7: #{tpu_custom_call.1} parent=1 // pred_check_branch
      %22 = sbr.rel (0) target = $region9
    $region8: #{tpu_custom_call.1} parent=1 // pred_region
      %s24 = ssub.s32 16, 16
      %25 = vsyncadd [#allocation6], %s24
      %s27 = sshll.u32 [#allocation5], 4
      %s28 = int_to_ptr.vmem [resolvable:$true] %s27
      %30 = dma.hbm_to_vmem [thread:$0]  %s1, 16, %s28, [#allocation6]
    $region9: #{tpu_custom_call.1} parent=1 // pred_fallthru
      _
    // Predicated region
    $region10: #{tpu_custom_call.1} parent=1 // pred_check
      _
    $region11: #{tpu_custom_call.1} parent=1 // pred_check_branch
      %32 = sbr.rel (0) target = $region13
    $region12: #{tpu_custom_call.1} parent=1 // pred_region
      %s34 = ssub.s32 16, 16
      %35 = vsyncadd [#allocation6], %s34
      %s37 = sshll.u32 [#allocation7], 4
      %s38 = int_to_ptr.vmem [resolvable:$true] %s37
      %40 = dma.hbm_to_vmem [thread:$0]  %s2, 16, %s38, [#allocation6]
    $region13: #{tpu_custom_call.1} parent=1 // pred_fallthru
      _
    // Predicated region
    $region14: #{tpu_custom_call.1} parent=1 // pred_check
      _
    $region15: #{tpu_custom_call.1} parent=1 // pred_check_branch
      %42 = sbr.rel (0) target = $region17
    $region16: #{tpu_custom_call.1} parent=1 // pred_region
      %43 = dma.done [#allocation3], 128
    $region17: #{tpu_custom_call.1} parent=1 // pred_fallthru
      _
    // Predicated region
    $region18: #{tpu_custom_call.1} parent=1 // pred_check
      _
    $region19: #{tpu_custom_call.1} parent=1 // pred_check_branch
      %45 = sbr.rel (0) target = $region21
    $region20: #{tpu_custom_call.1} parent=1 // pred_region
      %46 = dma.done [#allocation6], 16
    $region21: #{tpu_custom_call.1} parent=1 // pred_fallthru
      _
    // Predicated region
    $region22: #{tpu_custom_call.1} parent=1 // pred_check
      _
    $region23: #{tpu_custom_call.1} parent=1 // pred_check_branch
      %48 = sbr.rel (0) target = $region25
    $region24: #{tpu_custom_call.1} parent=1 // pred_region
      %49 = dma.done [#allocation6], 16
    $region25: #{tpu_custom_call.1} parent=1 // pred_fallthru
      _
    %v50 = vld [vmem:[#allocation2] sm:$0xff]
    %v51 = vld [vmem:[#allocation5] sm:$0x1]
    %v52 = vunpack.c.l.bf16 %v51
    %v53 = vld [vmem:[#allocation7] sm:$0x1]
    %v54 = vunpack.c.l.bf16 %v53
    %56 = vset.pattern.permute.xlu0 0
    %57 = vperm.xlu0 %56, %v50
    %v58 = vpop.permute.xlu0 %57
    %v60 = vlaneseq
    %v61 = vshrl.u32 %v60, 7
    %v62 = vsub.s32 0, %v61
    %v63 = vrot.slane %v52, %v62
    %v64 = vmul.f32 %v58, %v63
    %65 = vset.pattern.permute.xlu0 1
    %66 = vperm.xlu0 %65, %v50
    %v67 = vpop.permute.xlu0 %66
    %v69 = vlaneseq
    %v70 = vshrl.u32 %v69, 7
    %v71 = vsub.s32 1, %v70
    %v72 = vrot.slane %v52, %v71
    %v73 = vmul.f32 %v67, %v72
    %v74 = vadd.f32 %v64, %v73
    %v75 = vlaneseq
    %v76 = vshrl.u32 %v75, 7
    %v77 = vsub.s32 0, %v76
    %v78 = vrot.slane %v54, %v77
    %v79 = vadd.f32 %v74, %v78
    %v80 = vtanh.pop %v79
    %81 = vst [vmem:[#allocation8] sm:$0xff] %v80
    // Predicated region
    $region26: #{tpu_custom_call.1} parent=1 // pred_check
      _
    $region27: #{tpu_custom_call.1} parent=1 // pred_check_branch
      %83 = sbr.rel (0) target = $region29
    $region28: #{tpu_custom_call.1} parent=1 // pred_region
      %s85 = ssub.s32 128, 128
      %86 = vsyncadd [#allocation4], %s85
      %s88 = sshll.u32 [#allocation8], 4
      %s89 = int_to_ptr.vmem [resolvable:$true] %s88
      %91 = dma.vmem_to_hbm [thread:$0]  %s89, 128, %s3, [#allocation4]
    $region29: #{tpu_custom_call.1} parent=1 // pred_fallthru
      _
    // Predicated region
    $region30: #{tpu_custom_call.1} parent=1 // pred_check
      _
    $region31: #{tpu_custom_call.1} parent=1 // pred_check_branch
      %93 = sbr.rel (0) target = $region33
    $region32: #{tpu_custom_call.1} parent=1 // pred_region
      %94 = dma.done [#allocation4], 128
    $region33: #{tpu_custom_call.1} parent=1 // pred_fallthru
      _
    %95 = vsyncpa [#allocation3], 1
    %96 = vsyncpa [#allocation6], 1
    %97 = vsyncpa [#allocation4], 1

</llo_original>
